<compile_context>
chip_gen: v7x
topology: tpu7x:2x2x1
jax: 0.10.0
libtpu: 0.0.40
codegen_flags: <defaults>
</compile_context>

<pallas_src>
import functools
import math

import jax
import jax.numpy as jnp
from jax.experimental import pallas as pl
from jax.experimental.pallas import tpu as pltpu


# ------------------------------ kernel ---------------------------------------
def encoder_input_kernel(x_ref, w_ref, b_ref, g_ref, beta_ref, pe_ref, o_ref,
                         *, hidden_dim):
    # x_ref : (TS, Din)   w_ref : (Din, H)   b/g/beta : (1, H)
    # pe_ref: (TS, H)     o_ref : (TS, H)
    y = jnp.dot(x_ref[...], w_ref[...], preferred_element_type=jnp.float32)
    y = y + b_ref[...] + pe_ref[...]

    # LayerNorm over the hidden dim (matches nn.LayerNorm, eps=1e-5).
    inv_h = 1.0 / float(hidden_dim)
    mean = jnp.sum(y, axis=-1, keepdims=True) * inv_h
    cen = y - mean
    var = jnp.sum(cen * cen, axis=-1, keepdims=True) * inv_h
    yn = cen * jax.lax.rsqrt(var + 1e-5)          # rsqrt -> EUP slot
    o_ref[...] = (yn * g_ref[...] + beta_ref[...]).astype(o_ref.dtype)


# ------------------------------ helpers ---------------------------------------
def make_positional_encoding(max_len, d_model):
    """Sinusoidal PE buffer, identical to PyTorch PositionalEncoding.__init__."""
    position = jnp.arange(max_len, dtype=jnp.float32)[:, None]          # (L, 1)
    div_term = jnp.exp(
        jnp.arange(0, d_model, 2, dtype=jnp.float32) * (-math.log(10000.0) / d_model)
    )                                                                   # (H/2,)
    pe = jnp.zeros((max_len, d_model), dtype=jnp.float32)
    pe = pe.at[:, 0::2].set(jnp.sin(position * div_term))
    pe = pe.at[:, 1::2].set(jnp.cos(position * div_term))
    return pe[None]                                                     # (1, L, H)


def _pick_seq_tile(S, cap=512):
    """Largest seq tile <= cap that divides S and is a multiple of 8 (or S itself)."""
    if S <= cap:
        return S
    for t in range(cap, 7, -1):
        if S % t == 0 and t % 8 == 0:
            return t
    return S


# ------------------------------ glue ------------------------------------------
def transformer_encoder_input(x, w, b, gamma, beta, pe_buffer):
    """x: (B, S, D_in); w: (H, D_in); b/gamma/beta: (H,); pe_buffer: (1, L, H)."""
    B, S, Din = x.shape
    H = w.shape[0]

    TS = _pick_seq_tile(S)
    n_seq_tiles = S // TS

    pos_enc = pe_buffer[:, :S, :]                       # (1, S, H) second output

    wT = jnp.transpose(w)                               # (Din, H)
    b2 = b.reshape(1, H)
    g2 = gamma.reshape(1, H)
    beta2 = beta.reshape(1, H)
    pe2 = pos_enc[0]                                    # (S, H) -- no batch tiling

    # VMEM budget: double-buffered per-step tiles + resident params + headroom,
    # capped at 48 MiB so it also fits v7x's 64 MiB per-TC VMEM.
    step_bytes = 4 * (TS * Din + 2 * TS * H)            # x in, pe in, out
    resident_bytes = 4 * (Din * H + 3 * H)
    vmem_limit = int(min(max(4 * step_bytes + 2 * resident_bytes + (4 << 20),
                             16 << 20), 48 << 20))

    kernel = functools.partial(encoder_input_kernel, hidden_dim=H)

    out = pl.pallas_call(
        kernel,
        out_shape=jax.ShapeDtypeStruct((B, S, H), x.dtype),
        grid=(B, n_seq_tiles),
        in_specs=[
            pl.BlockSpec((None, TS, Din), lambda bi, si: (bi, si, 0)),  # x tile
            pl.BlockSpec((Din, H), lambda bi, si: (0, 0)),              # W (resident)
            pl.BlockSpec((1, H), lambda bi, si: (0, 0)),                # bias
            pl.BlockSpec((1, H), lambda bi, si: (0, 0)),                # gamma
            pl.BlockSpec((1, H), lambda bi, si: (0, 0)),                # beta
            pl.BlockSpec((TS, H), lambda bi, si: (si, 0)),              # PE: seq only
        ],
        out_specs=pl.BlockSpec((None, TS, H), lambda bi, si: (bi, si, 0)),
        compiler_params=pltpu.CompilerParams(
            dimension_semantics=("parallel", "parallel"),
            vmem_limit_bytes=vmem_limit,
        ),
    )(x, wT, b2, g2, beta2, pe2)

    return out, pos_enc


# ------------------------------ reference (pure JAX) ---------------------------
def reference(x, w, b, gamma, beta, pe_buffer):
    y = jnp.einsum("bsd,hd->bsh", x, w) + b
    pos_enc = pe_buffer[:, : x.shape[1], :]
    y = y + pos_enc
    mean = jnp.mean(y, axis=-1, keepdims=True)
    var = jnp.mean((y - mean) ** 2, axis=-1, keepdims=True)
    yn = (y - mean) / jnp.sqrt(var + 1e-5)
    return yn * gamma + beta, pos_enc


if __name__ == "__main__":
    B, S, D_IN, H = 2, 8, 16, 32  # cfg.input_dim = 16, cfg.hidden_dim = 32
    MAX_LEN = 5000

    key = jax.random.PRNGKey(0)
    kx, kw, kb = jax.random.split(key, 3)

    x = jax.random.normal(kx, (B, S, D_IN), dtype=jnp.float32)

    # Deterministic parameter init (shapes from nn.Linear / nn.LayerNorm).
    bound = 1.0 / math.sqrt(D_IN)
    w = jax.random.uniform(kw, (H, D_IN), minval=-bound, maxval=bound, dtype=jnp.float32)
    b = jax.random.uniform(kb, (H,), minval=-bound, maxval=bound, dtype=jnp.float32)
    gamma = jnp.ones((H,), dtype=jnp.float32)   # nn.LayerNorm default weight
    beta = jnp.zeros((H,), dtype=jnp.float32)   # nn.LayerNorm default bias

    pe_buffer = make_positional_encoding(MAX_LEN, H)

    out, pos_enc = transformer_encoder_input(x, w, b, gamma, beta, pe_buffer)
    out = jax.block_until_ready(out)
    pos_enc = jax.block_until_ready(pos_enc)

    ref_out, ref_pe = reference(x, w, b, gamma, beta, pe_buffer)
    assert out.shape == (B, S, H) and pos_enc.shape == (1, S, H)
    assert jnp.allclose(out, ref_out, atol=1e-4, rtol=1e-4)
    assert jnp.allclose(pos_enc, ref_pe)

    print("KERNEL_OK")
</pallas_src>

<mosaic_0001>
module attributes {stable_mosaic.version = 11 : i64} {
  func.func @encoder_input_kernel(%arg0: i32, %arg1: i32, %arg2: memref<1x8x16xf32, #tpu.memory_space<vmem>>, %arg3: memref<16x32xf32, #tpu.memory_space<vmem>>, %arg4: memref<1x32xf32, #tpu.memory_space<vmem>>, %arg5: memref<1x32xf32, #tpu.memory_space<vmem>>, %arg6: memref<1x32xf32, #tpu.memory_space<vmem>>, %arg7: memref<8x32xf32, #tpu.memory_space<vmem>>, %arg8: memref<1x8x32xf32, #tpu.memory_space<vmem>>) attributes {dimension_semantics = [#tpu.dimension_semantics<parallel>, #tpu.dimension_semantics<parallel>], iteration_bounds = array<i64: 2, 1>, scalar_prefetch = 0 : i64, scratch_operands = 0 : i64, tpu.core_type = #tpu.core_type<tc>, window_params = [{transform_indices = @transform_0, window_bounds = array<i64: 1, 8, 16>}, {pipeline_mode = #tpu.pipeline_mode<synchronous>, transform_indices = @transform_1, window_bounds = array<i64: 16, 32>}, {pipeline_mode = #tpu.pipeline_mode<synchronous>, transform_indices = @transform_2, window_bounds = array<i64: 1, 32>}, {pipeline_mode = #tpu.pipeline_mode<synchronous>, transform_indices = @transform_3, window_bounds = array<i64: 1, 32>}, {pipeline_mode = #tpu.pipeline_mode<synchronous>, transform_indices = @transform_4, window_bounds = array<i64: 1, 32>}, {transform_indices = @transform_5, window_bounds = array<i64: 8, 32>}, {transform_indices = @transform_6, window_bounds = array<i64: 1, 8, 32>}]} {
    %c0 = arith.constant 0 : index
    %c0_0 = arith.constant 0 : index
    %c0_1 = arith.constant 0 : index
    %0 = vector.load %arg2[%c0, %c0_0, %c0_1] : memref<1x8x16xf32, #tpu.memory_space<vmem>>, vector<1x8x16xf32>
    %1 = vector.shape_cast %0 : vector<1x8x16xf32> to vector<8x16xf32>
    %c0_2 = arith.constant 0 : index
    %c0_3 = arith.constant 0 : index
    %2 = vector.load %arg3[%c0_2, %c0_3] : memref<16x32xf32, #tpu.memory_space<vmem>>, vector<16x32xf32>
    %cst = arith.constant dense<0.000000e+00> : vector<8x32xf32>
    %3 = tpu.matmul %1, %2, %cst {dimension_numbers = #tpu.dot_dimension_numbers<[1], [0], [0], [1], [0, 0, 1, 1], [], []>} : vector<8x16xf32>, vector<16x32xf32>, vector<8x32xf32> -> vector<8x32xf32>
    %c0_4 = arith.constant 0 : index
    %c0_5 = arith.constant 0 : index
    %4 = vector.load %arg4[%c0_4, %c0_5] : memref<1x32xf32, #tpu.memory_space<vmem>>, vector<1x32xf32>
    %5 = vector.broadcast %4 : vector<1x32xf32> to vector<8x32xf32>
    %6 = arith.addf %3, %5 : vector<8x32xf32>
    %c0_6 = arith.constant 0 : index
    %c0_7 = arith.constant 0 : index
    %7 = vector.load %arg7[%c0_6, %c0_7] : memref<8x32xf32, #tpu.memory_space<vmem>>, vector<8x32xf32>
    %8 = arith.addf %6, %7 : vector<8x32xf32>
    %cst_8 = arith.constant dense<0.000000e+00> : vector<8xf32>
    %9 = vector.multi_reduction <add>, %8, %cst_8 [1] : vector<8x32xf32> to vector<8xf32>
    %10 = vector.shape_cast %9 : vector<8xf32> to vector<8x1xf32>
    %cst_9 = arith.constant 3.125000e-02 : f32
    %11 = vector.broadcast %cst_9 : f32 to vector<8x1xf32>
    %12 = arith.mulf %10, %11 : vector<8x1xf32>
    %13 = vector.broadcast %12 : vector<8x1xf32> to vector<8x32xf32>
    %14 = arith.subf %8, %13 : vector<8x32xf32>
    %15 = arith.mulf %14, %14 : vector<8x32xf32>
    %cst_10 = arith.constant dense<0.000000e+00> : vector<8xf32>
    %16 = vector.multi_reduction <add>, %15, %cst_10 [1] : vector<8x32xf32> to vector<8xf32>
    %17 = vector.shape_cast %16 : vector<8xf32> to vector<8x1xf32>
    %cst_11 = arith.constant 3.125000e-02 : f32
    %18 = vector.broadcast %cst_11 : f32 to vector<8x1xf32>
    %19 = arith.mulf %17, %18 : vector<8x1xf32>
    %cst_12 = arith.constant 9.99999974E-6 : f32
    %20 = vector.broadcast %cst_12 : f32 to vector<8x1xf32>
    %21 = arith.addf %19, %20 : vector<8x1xf32>
    %22 = math.rsqrt %21 : vector<8x1xf32>
    %23 = vector.broadcast %22 : vector<8x1xf32> to vector<8x32xf32>
    %24 = arith.mulf %14, %23 : vector<8x32xf32>
    %c0_13 = arith.constant 0 : index
    %c0_14 = arith.constant 0 : index
    %25 = vector.load %arg5[%c0_13, %c0_14] : memref<1x32xf32, #tpu.memory_space<vmem>>, vector<1x32xf32>
    %26 = vector.broadcast %25 : vector<1x32xf32> to vector<8x32xf32>
    %27 = arith.mulf %24, %26 : vector<8x32xf32>
    %c0_15 = arith.constant 0 : index
    %c0_16 = arith.constant 0 : index
    %28 = vector.load %arg6[%c0_15, %c0_16] : memref<1x32xf32, #tpu.memory_space<vmem>>, vector<1x32xf32>
    %29 = vector.broadcast %28 : vector<1x32xf32> to vector<8x32xf32>
    %30 = arith.addf %27, %29 : vector<8x32xf32>
    %c0_17 = arith.constant 0 : index
    %c0_18 = arith.constant 0 : index
    %c0_19 = arith.constant 0 : index
    %31 = vector.load %arg8[%c0_17, %c0_18, %c0_19] : memref<1x8x32xf32, #tpu.memory_space<vmem>>, vector<1x8x32xf32>
    %32 = vector.shape_cast %31 : vector<1x8x32xf32> to vector<8x32xf32>
    %33 = vector.shape_cast %30 : vector<8x32xf32> to vector<1x8x32xf32>
    tpu.vector_store %arg8[%c0_17, %c0_18, %c0_19], %33 {strides = array<i32>} : memref<1x8x32xf32, #tpu.memory_space<vmem>>, vector<1x8x32xf32>,
    return
  }
  func.func @transform_0(%arg0: i32, %arg1: i32) -> (i32, i32, i32) {
    %c0_i32 = arith.constant 0 : i32
    %c0_i32_0 = arith.constant 0 : i32
    return %arg0, %arg1, %c0_i32 : i32, i32, i32
  }
  func.func @transform_1(%arg0: i32, %arg1: i32) -> (i32, i32) {
    %c0_i32 = arith.constant 0 : i32
    %c0_i32_0 = arith.constant 0 : i32
    %c0_i32_1 = arith.constant 0 : i32
    return %c0_i32, %c0_i32_0 : i32, i32
  }
  func.func @transform_2(%arg0: i32, %arg1: i32) -> (i32, i32) {
    %c0_i32 = arith.constant 0 : i32
    %c0_i32_0 = arith.constant 0 : i32
    %c0_i32_1 = arith.constant 0 : i32
    return %c0_i32, %c0_i32_0 : i32, i32
  }
  func.func @transform_3(%arg0: i32, %arg1: i32) -> (i32, i32) {
    %c0_i32 = arith.constant 0 : i32
    %c0_i32_0 = arith.constant 0 : i32
    %c0_i32_1 = arith.constant 0 : i32
    return %c0_i32, %c0_i32_0 : i32, i32
  }
  func.func @transform_4(%arg0: i32, %arg1: i32) -> (i32, i32) {
    %c0_i32 = arith.constant 0 : i32
    %c0_i32_0 = arith.constant 0 : i32
    %c0_i32_1 = arith.constant 0 : i32
    return %c0_i32, %c0_i32_0 : i32, i32
  }
  func.func @transform_5(%arg0: i32, %arg1: i32) -> (i32, i32) {
    %c0_i32 = arith.constant 0 : i32
    %c0_i32_0 = arith.constant 0 : i32
    return %arg1, %c0_i32 : i32, i32
  }
  func.func @transform_6(%arg0: i32, %arg1: i32) -> (i32, i32, i32) {
    %c0_i32 = arith.constant 0 : i32
    %c0_i32_0 = arith.constant 0 : i32
    return %arg0, %arg1, %c0_i32 : i32, i32, i32
  }
}

</mosaic_0001>

<llo_original>
// kernel: tpu_custom_call.1
$region0: #{tpu_custom_call.1}
  #allocation0 [shape = 'u32[]', space=smem, size = 0x4, offset = 0x4, fixed_abs, tag = 'smem constant byte address 0x4 - core index']
  #allocation1 [shape = 'u32[144,128]{1,0:T(1,128)}', space=vmem, size = 0x12000, scoped, tag = 'internal scratch']
  %s0 = inlined_call_operand.hbm [shape: f32[2,8,16], index: 0, kind: input, shape index: {}]
  %s1 = inlined_call_operand.hbm [shape: f32[16,32], index: 1, kind: input, shape index: {}]
  %s2 = inlined_call_operand.vmem [shape: f32[1,32], index: 2, kind: input, shape index: {}]
  %s3 = inlined_call_operand.vmem [shape: f32[1,32], index: 3, kind: input, shape index: {}]
  %s4 = inlined_call_operand.vmem [shape: f32[1,32], index: 4, kind: input, shape index: {}]
  %s5 = inlined_call_operand.vmem [shape: f32[8,32], index: 5, kind: input, shape index: {}]
  %s6 = inlined_call_operand.hbm [shape: f32[2,8,32], index: 6, kind: output, shape index: {}]
  %s7 = sld [smem:[#allocation0]]
  $region65: #{tpu_custom_call.1} parent=0
    _
  %s9 = ssub.s32 1, %s7
  %s10 = scalar_select 0, %s9, %s7
  $region1: #{tpu_custom_call.1} parent=0
    #allocation2 [shape = 'u8[8192]{0}', space=vmem, size = 0x2000, scoped, tag = 'input window, operand 0']
    #allocation3 [shape = 's32[2]{0}', space=sflag, size = 0x8, scoped, tag = 'scoped memory for tpu_custom_call.1']
    #allocation4 [shape = 's32[2]{0}', space=sflag, size = 0x8, scoped, tag = 'scoped memory for tpu_custom_call.1']
    #allocation5 [shape = 'u8[8192]{0}', space=vmem, size = 0x2000, scoped, tag = 'input window, operand 1, single buffered']
    #allocation6 [shape = 's32[1]{0}', space=sflag, size = 0x4, scoped, tag = 'scoped memory for tpu_custom_call.1']
    #allocation7 [shape = 'u8[8192]{0}', space=vmem, size = 0x2000, scoped, tag = 'output window, operand 0']
    %11 = vsyncpa [#allocation3], 0
    %s12 = scalar_lea.sflag [#allocation3], 1
    %13 = vsyncpa %s12, 0
    %14 = vsyncpa [#allocation6], 0
    %15 = vsyncpa [#allocation4], 0
    %s16 = scalar_lea.sflag [#allocation4], 1
    %17 = vsyncpa %s16, 0
    loop: start=0, step=1, limit=4
    $region2: #{tpu_custom_call.1} parent=1 // loop_pre_header
      _
    $region3: #{tpu_custom_call.1} parent=1 // loop_header
      %s19 = sphi 0, %s23
      %p20 = scmp.ge.s32.totalorder %s19, 4
      %s26 = sphi 0, %s38
      %s27 = sphi 0, %s34
      %s28 = sphi 0, %s26
      %s29 = sphi 0, %s27
      %s30 = sphi 0, %s28
      %s31 = sphi 0, %s29
      %s43 = sphi 0, %s45
      %s46 = sphi 0, %s43
      %s47 = sphi 0, %s46
      %s63 = sphi 0, %s47
      %s67 = sphi 0, %s67
      %s69 = sphi 0, %s67
      %s70 = sphi 0, %s69
      %s84 = sphi 0, %s70
      %s88 = sphi 0, %s88
      %s90 = sphi 0, %s88
      %s91 = sphi 0, %s90
      %s105 = sphi 0, %s91
      %s109 = sphi 0, %s109
      %s111 = sphi 0, %s109
      %s112 = sphi 0, %s111
      %s126 = sphi 0, %s112
      %s130 = sphi 0, %s130
      %s132 = sphi 0, %s130
      %s133 = sphi 0, %s132
      %s147 = sphi 0, %s133
      %s153 = sphi 0, %s155
      %s156 = sphi 0, %s153
      %s157 = sphi 0, %s156
      %s173 = sphi 0, %s157
      %s181 = sphi 0, %s183
      %s184 = sphi 0, %s181
      %s185 = sphi 0, %s184
      %s201 = sphi 0, %s185
    $region4: #{tpu_custom_call.1} parent=1 // loop_header_branch
      %22 = sbr.rel (%p20) target = $region8
    $region5: #{tpu_custom_call.1} parent=1 // loop_body
      %s24 = ssub.s32 %s19, 1
      %s25 = ssub.s32 %s19, 2
      %s32 = sadd.s32 1, %s27
      %p33 = scmp.ge.s32.totalorder %s32, 1
      %s34 = scalar_select %p33, 0, %s32
      %s35 = sadd.s32 1, %s26
      %s36 = scalar_select %p33, %s35, %s26
      %p37 = scmp.ge.s32.totalorder %s36, 2
      %s38 = scalar_select %p37, 0, %s36
      %s39 = ssub.s32 %s26, %s38
      %s40 = ssub.s32 %s27, %s34
      %s41 = sor.u32 %s39, %s40
      %p42 = scmp.eq.s32.totalorder %s41, 0
      %s44 = sadd.s32 %s43, 1
      %s45 = scalar_select %p42, %s43, %s44
      %p48 = pneg %p42
      %p49 = scmp.eq.s32.totalorder %s19, 1
      %p50 = por %p48, %p49
      %p51 = scmp.ne.s32.totalorder %s43, %s46
      %p52 = scmp.eq.s32.totalorder %s19, 0
      %p53 = por %p51, %p52
      %p54 = scmp.ne.s32.totalorder %s43, %s46
      %p55 = scmp.eq.s32.totalorder %s24, 1
      %p56 = por %p54, %p55
      %p57 = scmp.ne.s32.totalorder %s46, %s47
      %p58 = scmp.eq.s32.totalorder %s24, 0
      %p59 = por %p57, %p58
      %p60 = scmp.ne.s32.totalorder %s46, %s47
      %p61 = scmp.eq.s32.totalorder %s25, 1
      %p62 = por %p60, %p61
      %p64 = scmp.ne.s32.totalorder %s47, %s63
      %p65 = scmp.eq.s32.totalorder %s25, 0
      %p66 = por %p64, %p65
      %s68 = sadd.s32 %s67, 1
      %p71 = scmp.eq.s32.totalorder %s19, 1
      %p72 = scmp.ne.s32.totalorder %s67, %s69
      %p73 = scmp.eq.s32.totalorder %s19, 0
      %p74 = por %p72, %p73
      %p75 = scmp.ne.s32.totalorder %s67, %s69
      %p76 = scmp.eq.s32.totalorder %s24, 1
      %p77 = por %p75, %p76
      %p78 = scmp.ne.s32.totalorder %s69, %s70
      %p79 = scmp.eq.s32.totalorder %s24, 0
      %p80 = por %p78, %p79
      %p81 = scmp.ne.s32.totalorder %s69, %s70
      %p82 = scmp.eq.s32.totalorder %s25, 1
      %p83 = por %p81, %p82
      %p85 = scmp.ne.s32.totalorder %s70, %s84
      %p86 = scmp.eq.s32.totalorder %s25, 0
      %p87 = por %p85, %p86
      %s89 = sadd.s32 %s88, 1
      %p92 = scmp.eq.s32.totalorder %s19, 1
      %p93 = scmp.ne.s32.totalorder %s88, %s90
      %p94 = scmp.eq.s32.totalorder %s19, 0
      %p95 = por %p93, %p94
      %p96 = scmp.ne.s32.totalorder %s88, %s90
      %p97 = scmp.eq.s32.totalorder %s24, 1
      %p98 = por %p96, %p97
      %p99 = scmp.ne.s32.totalorder %s90, %s91
      %p100 = scmp.eq.s32.totalorder %s24, 0
      %p101 = por %p99, %p100
      %p102 = scmp.ne.s32.totalorder %s90, %s91
      %p103 = scmp.eq.s32.totalorder %s25, 1
      %p104 = por %p102, %p103
      %p106 = scmp.ne.s32.totalorder %s91, %s105
      %p107 = scmp.eq.s32.totalorder %s25, 0
      %p108 = por %p106, %p107
      %s110 = sadd.s32 %s109, 1
      %p113 = scmp.eq.s32.totalorder %s19, 1
      %p114 = scmp.ne.s32.totalorder %s109, %s111
      %p115 = scmp.eq.s32.totalorder %s19, 0
      %p116 = por %p114, %p115
      %p117 = scmp.ne.s32.totalorder %s109, %s111
      %p118 = scmp.eq.s32.totalorder %s24, 1
      %p119 = por %p117, %p118
      %p120 = scmp.ne.s32.totalorder %s111, %s112
      %p121 = scmp.eq.s32.totalorder %s24, 0
      %p122 = por %p120, %p121
      %p123 = scmp.ne.s32.totalorder %s111, %s112
      %p124 = scmp.eq.s32.totalorder %s25, 1
      %p125 = por %p123, %p124
      %p127 = scmp.ne.s32.totalorder %s112, %s126
      %p128 = scmp.eq.s32.totalorder %s25, 0
      %p129 = por %p127, %p128
      %s131 = sadd.s32 %s130, 1
      %p134 = scmp.eq.s32.totalorder %s19, 1
      %p135 = scmp.ne.s32.totalorder %s130, %s132
      %p136 = scmp.eq.s32.totalorder %s19, 0
      %p137 = por %p135, %p136
      %p138 = scmp.ne.s32.totalorder %s130, %s132
      %p139 = scmp.eq.s32.totalorder %s24, 1
      %p140 = por %p138, %p139
      %p141 = scmp.ne.s32.totalorder %s132, %s133
      %p142 = scmp.eq.s32.totalorder %s24, 0
      %p143 = por %p141, %p142
      %p144 = scmp.ne.s32.totalorder %s132, %s133
      %p145 = scmp.eq.s32.totalorder %s25, 1
      %p146 = por %p144, %p145
      %p148 = scmp.ne.s32.totalorder %s133, %s147
      %p149 = scmp.eq.s32.totalorder %s25, 0
      %p150 = por %p148, %p149
      %s151 = ssub.s32 %s27, %s34
      %p152 = scmp.eq.s32.totalorder %s151, 0
      %s154 = sadd.s32 %s153, 1
      %s155 = scalar_select %p152, %s153, %s154
      %p158 = pneg %p152
      %p159 = scmp.eq.s32.totalorder %s19, 1
      %p160 = por %p158, %p159
      %p161 = scmp.ne.s32.totalorder %s153, %s156
      %p162 = scmp.eq.s32.totalorder %s19, 0
      %p163 = por %p161, %p162
      %p164 = scmp.ne.s32.totalorder %s153, %s156
      %p165 = scmp.eq.s32.totalorder %s24, 1
      %p166 = por %p164, %p165
      %p167 = scmp.ne.s32.totalorder %s156, %s157
      %p168 = scmp.eq.s32.totalorder %s24, 0
      %p169 = por %p167, %p168
      %p170 = scmp.ne.s32.totalorder %s156, %s157
      %p171 = scmp.eq.s32.totalorder %s25, 1
      %p172 = por %p170, %p171
      %p174 = scmp.ne.s32.totalorder %s157, %s173
      %p175 = scmp.eq.s32.totalorder %s25, 0
      %p176 = por %p174, %p175
      %s177 = ssub.s32 %s26, %s38
      %s178 = ssub.s32 %s27, %s34
      %s179 = sor.u32 %s177, %s178
      %p180 = scmp.eq.s32.totalorder %s179, 0
      %s182 = sadd.s32 %s181, 1
      %s183 = scalar_select %p180, %s181, %s182
      %p186 = pneg %p180
      %p187 = scmp.eq.s32.totalorder %s19, 1
      %p188 = por %p186, %p187
      %p189 = scmp.ne.s32.totalorder %s181, %s184
      %p190 = scmp.eq.s32.totalorder %s19, 0
      %p191 = por %p189, %p190
      %p192 = scmp.ne.s32.totalorder %s181, %s184
      %p193 = scmp.eq.s32.totalorder %s24, 1
      %p194 = por %p192, %p193
      %p195 = scmp.ne.s32.totalorder %s184, %s185
      %p196 = scmp.eq.s32.totalorder %s24, 0
      %p197 = por %p195, %p196
      %p198 = scmp.ne.s32.totalorder %s184, %s185
      %p199 = scmp.eq.s32.totalorder %s25, 1
      %p200 = por %p198, %p199
      %p202 = scmp.ne.s32.totalorder %s185, %s201
      %p203 = scmp.eq.s32.totalorder %s25, 0
      %p204 = por %p202, %p203
      %p205 = scmp.le.s32.totalorder 1, %s19
      %p206 = scmp.lt.s32.totalorder %s19, 3
      %p207 = pnand %p205, %p206
      %p208 = pneg %p207
      // Predicated region
      $region9: #{tpu_custom_call.1} parent=5 // pred_check
        _
      $region10: #{tpu_custom_call.1} parent=5 // pred_check_branch
        %210 = sbr.rel (%p207) target = $region12
      $region11: #{tpu_custom_call.1} parent=5 // pred_region
        %s211 = ssub.s32 %s19, 1
        // Predicated region
        $region13: #{tpu_custom_call.1} parent=11 // pred_check
          %p212 = pneg %p80
        $region14: #{tpu_custom_call.1} parent=11 // pred_check_branch
          %214 = sbr.rel (%p212) target = $region16
        $region15: #{tpu_custom_call.1} parent=11 // pred_region
          %s216 = ssub.s32 256, 256
          %217 = vsyncadd [#allocation6], %s216
          %s218 = sshll.u32 [#allocation5], 4
          %s219 = int_to_ptr.vmem [resolvable:$true] %s218
          %224 = dma.hbm_to_vmem [thread:$0]  %s1, 256, %s219, [#allocation6], 128, 128, 8
        $region16: #{tpu_custom_call.1} parent=11 // pred_fallthru
          _
        // Predicated region
        $region17: #{tpu_custom_call.1} parent=11 // pred_check
          %p225 = pneg %p101
        $region18: #{tpu_custom_call.1} parent=11 // pred_check_branch
          %227 = sbr.rel (%p225) target = $region20
        $region19: #{tpu_custom_call.1} parent=11 // pred_region
          _
        $region20: #{tpu_custom_call.1} parent=11 // pred_fallthru
          _
        // Predicated region
        $region21: #{tpu_custom_call.1} parent=11 // pred_check
          %p228 = pneg %p122
        $region22: #{tpu_custom_call.1} parent=11 // pred_check_branch
          %230 = sbr.rel (%p228) target = $region24
        $region23: #{tpu_custom_call.1} parent=11 // pred_region
          _
        $region24: #{tpu_custom_call.1} parent=11 // pred_fallthru
          _
        // Predicated region
        $region25: #{tpu_custom_call.1} parent=11 // pred_check
          %p231 = pneg %p143
        $region26: #{tpu_custom_call.1} parent=11 // pred_check_branch
          %233 = sbr.rel (%p231) target = $region28
        $region27: #{tpu_custom_call.1} parent=11 // pred_region
          _
        $region28: #{tpu_custom_call.1} parent=11 // pred_fallthru
          _
        // Predicated region
        $region29: #{tpu_custom_call.1} parent=11 // pred_check
          %p234 = pneg %p169
        $region30: #{tpu_custom_call.1} parent=11 // pred_check_branch
          %236 = sbr.rel (%p234) target = $region32
        $region31: #{tpu_custom_call.1} parent=11 // pred_region
          %p237 = scmp.lt.s32.totalorder %s29, 0
          %s238 = scalar_select %p237, %s29, 0
          %s239 = smul.addr %s238, 8
          %s240 = scalar_lea.vmem %s5, %s239
        $region32: #{tpu_custom_call.1} parent=11 // pred_fallthru
          _
      $region12: #{tpu_custom_call.1} parent=5 // pred_fallthru
        _
      %p241 = scmp.lt.s32.totalorder %s19, 2
      // Predicated region
      $region33: #{tpu_custom_call.1} parent=5 // pred_check
        %p242 = pneg %p241
      $region34: #{tpu_custom_call.1} parent=5 // pred_check_branch
        %244 = sbr.rel (%p242) target = $region36
      $region35: #{tpu_custom_call.1} parent=5 // pred_region
        // Predicated region
        $region37: #{tpu_custom_call.1} parent=35 // pred_check
          %p245 = pneg %p53
        $region38: #{tpu_custom_call.1} parent=35 // pred_check_branch
          %247 = sbr.rel (%p245) target = $region40
        $region39: #{tpu_custom_call.1} parent=35 // pred_region
          %s248 = sand.u32 %s43, 1
          %s249 = scalar_lea.sflag [#allocation3], %s248
          %s250 = sand.u32 %s43, 1
          %s251 = smul.addr %s250, 8
          %s252 = scalar_lea.vmem [#allocation2], %s251
          %s254 = ssub.s32 128, 128
          %255 = vsyncadd %s249, %s254
          %s256 = sadd.s32 %s27, %s26
          %s257 = smul.addr %s256, 128
          %s258 = scalar_lea.hbm %s0, %s257
          %s260 = sshll.u32 %s252, 4
          %s261 = int_to_ptr.vmem [resolvable:$true] %s260
          %263 = dma.hbm_to_vmem [thread:$0]  %s258, 128, %s261, %s249
        $region40: #{tpu_custom_call.1} parent=35 // pred_fallthru
          _
      $region36: #{tpu_custom_call.1} parent=5 // pred_fallthru
        _
      %p264 = scmp.le.s32.totalorder 1, %s19
      %p265 = scmp.lt.s32.totalorder %s19, 3
      %p266 = pnand %p264, %p265
      %p267 = pneg %p266
      // Predicated region
      $region41: #{tpu_custom_call.1} parent=5 // pred_check
        _
      $region42: #{tpu_custom_call.1} parent=5 // pred_check_branch
        %269 = sbr.rel (%p266) target = $region44
      $region43: #{tpu_custom_call.1} parent=5 // pred_region
        %s270 = ssub.s32 %s19, 1
        %s271 = sand.u32 %s46, 1
        %s272 = scalar_lea.sflag [#allocation3], %s271
        %s273 = sand.u32 %s46, 1
        %s274 = smul.addr %s273, 8
        %s275 = scalar_lea.vmem [#allocation2], %s274
        // Predicated region
        $region45: #{tpu_custom_call.1} parent=43 // pred_check
          %p276 = pneg %p59
        $region46: #{tpu_custom_call.1} parent=43 // pred_check_branch
          %278 = sbr.rel (%p276) target = $region48
        $region47: #{tpu_custom_call.1} parent=43 // pred_region
          %279 = dma.done %s272, 128
        $region48: #{tpu_custom_call.1} parent=43 // pred_fallthru
          _
        // Predicated region
        $region49: #{tpu_custom_call.1} parent=43 // pred_check
          %p280 = pneg %p80
        $region50: #{tpu_custom_call.1} parent=43 // pred_check_branch
          %282 = sbr.rel (%p280) target = $region52
        $region51: #{tpu_custom_call.1} parent=43 // pred_region
          %283 = dma.done [#allocation6], 256
        $region52: #{tpu_custom_call.1} parent=43 // pred_fallthru
          _
        %s284 = sand.u32 %s46, 1
        %s285 = scalar_lea.sflag [#allocation3], %s284
        %s286 = sand.u32 %s46, 1
        %s287 = smul.addr %s286, 8
        %s288 = scalar_lea.vmem [#allocation2], %s287
        %p289 = pneg %p59
        %p290 = pneg %p56
        %p291 = pneg %p80
        %p292 = pneg %p77
        %p293 = pneg %p101
        %p294 = pneg %p98
        %p295 = pneg %p122
        %p296 = pneg %p119
        %p297 = pneg %p143
        %p298 = pneg %p140
        %p299 = scmp.lt.s32.totalorder %s29, 0
        %s300 = scalar_select %p299, %s29, 0
        %s301 = smul.addr %s300, 8
        %s302 = scalar_lea.vmem %s5, %s301
        %p303 = pneg %p169
        %p304 = pneg %p166
        %p305 = pneg %p197
        %p306 = pneg %p194
        %s307 = sand.u32 %s184, 1
        %s308 = scalar_lea.sflag [#allocation4], %s307
        %s309 = sand.u32 %s184, 1
        %s310 = smul.addr %s309, 8
        %s311 = scalar_lea.vmem [#allocation7], %s310
        %p312 = scmp.lt.s32.totalorder %s29, 0
        %s313 = scalar_select %p312, %s29, 0
        %s314 = smul.addr %s313, 8
        %s315 = scalar_lea.vmem %s5, %s314
        %v316 = vld [vmem:[%s275] sm:$0xff]
        %v317 = vld [vmem:[#allocation5] sm:$0xff]
        %v318 = vld [vmem:[#allocation5 + $0x8] sm:$0xff]
        %v319 = vld [vmem:[%s2] sm:$0x1]
        %v321 = vlaneseq
        %v322 = vshrl.u32 %v321, 7
        %v323 = vsub.s32 0, %v322
        %v324 = vrot.slane %v319, %v323
        %vm326 = vcmask 130048
        %v328 = vsel %vm326, %v316, 0
        %330 = vmatprep.subr.mxu0 0.0
        %331 = vmatpush1.msra.mxu0 %v317
        %332 = vmatprep.subr.mxu0 0.0
        %333 = vmatpush1.msra.mxu0 %v318
        %334 = vmatprep.subr.mxu0 0.0
        %335 = vmatpush1.msra.mxu0 0.0
        %336 = vmatprep.subr.mxu0 0.0
        %337 = vmatpush1.msra.mxu0 0.0
        %338 = vmatprep.subr.mxu0 0.0
        %339 = vmatpush1.msra.mxu0 0.0
        %340 = vmatprep.subr.mxu0 0.0
        %341 = vmatpush1.msra.mxu0 0.0
        %342 = vmatprep.subr.mxu0 0.0
        %343 = vmatpush1.msra.mxu0 0.0
        %344 = vmatprep.subr.mxu0 0.0
        %345 = vmatpush1.msra.mxu0 0.0
        %346 = vmatprep.subr.mxu0 0.0
        %347 = vmatpush1.msra.mxu0 0.0
        %348 = vmatprep.subr.mxu0 0.0
        %349 = vmatpush1.msra.mxu0 0.0
        %350 = vmatprep.subr.mxu0 0.0
        %351 = vmatpush1.msra.mxu0 0.0
        %352 = vmatprep.subr.mxu0 0.0
        %353 = vmatpush1.msra.mxu0 0.0
        %354 = vmatprep.subr.mxu0 0.0
        %355 = vmatpush1.msra.mxu0 0.0
        %356 = vmatprep.subr.mxu0 0.0
        %357 = vmatpush1.msra.mxu0 0.0
        %358 = vmatprep.subr.mxu0 0.0
        %359 = vmatpush1.msra.mxu0 0.0
        %360 = vmatprep.subr.mxu0 0.0
        %361 = vmatpush1.msra.mxu0 0.0
        %362 = vmatprep.subr.mxu0 0.0
        %363 = vmatpush1.msra.mxu0 0.0
        %364 = vmatprep.subr.mxu0 0.0
        %365 = vmatpush1.msra.mxu0 0.0
        %366 = vmatprep.subr.mxu0 0.0
        %367 = vmatpush1.msra.mxu0 0.0
        %368 = vmatprep.subr.mxu0 0.0
        %369 = vmatpush1.msra.mxu0 0.0
        %370 = vmatprep.subr.mxu0 0.0
        %371 = vmatpush1.msra.mxu0 0.0
        %372 = vmatprep.subr.mxu0 0.0
        %373 = vmatpush1.msra.mxu0 0.0
        %374 = vmatprep.subr.mxu0 0.0
        %375 = vmatpush1.msra.mxu0 0.0
        %376 = vmatprep.subr.mxu0 0.0
        %377 = vmatpush1.msra.mxu0 0.0
        %378 = vmatprep.subr.mxu0 0.0
        %379 = vmatpush1.msra.mxu0 0.0
        %380 = vmatprep.subr.mxu0 0.0
        %381 = vmatpush1.msra.mxu0 0.0
        %382 = vmatprep.subr.mxu0 0.0
        %383 = vmatpush1.msra.mxu0 0.0
        %384 = vmatprep.subr.mxu0 0.0
        %385 = vmatpush1.msra.mxu0 0.0
        %386 = vmatprep.subr.mxu0 0.0
        %387 = vmatpush1.msra.mxu0 0.0
        %388 = vmatprep.subr.mxu0 0.0
        %389 = vmatpush1.msra.mxu0 0.0
        %390 = vmatprep.subr.mxu0 0.0
        %391 = vmatpush1.msra.mxu0 0.0
        %392 = vmatprep.subr.mxu0 0.0
        %393 = vmatpush1.msra.mxu0 0.0
        %394 = vmatprep.mubr.f32.mxu0 0.0
        %395 = vmatmul.mubr.f32.gmra.mrb[0].mxu0 %v328
        %v396 = vpop.f32.mrb[0].mxu0
        %v397 = vadd.f32 %v324, %v396
        %v398 = vpop.f32.mrb[0].mxu0
        %399 = vdwg.mxu0
        %v400 = vld [vmem:[%s315] sm:$0xff]
        %v401 = vadd.f32 %v397, %v400
        %vm402 = vcmask 261120
        %v403 = vsel %vm402, %v401, 0.0
        %404 = vadd.xlane.f32.xlu0 %v403
        %v405 = vpop.xlane.xlu0 %404
        %v406 = vmul.f32 %v405, 0.03125
        %v407 = vsub.f32 %v401, %v406
        %v408 = vmul.f32 %v407, %v407
        %v409 = vsel %vm402, %v408, 0.0
        %410 = vadd.xlane.f32.xlu0 %v409
        %v411 = vpop.xlane.xlu0 %410
        %v412 = vmul.f32 %v411, 0.03125
        %v413 = vadd.f32 %v412, 1e-05
        %v414 = vrsqrt.pop %v413
        %v415 = vmul.f32 %v407, %v414
        %v416 = vld [vmem:[%s3] sm:$0x1]
        %v418 = vlaneseq
        %v419 = vshrl.u32 %v418, 7
        %v420 = vsub.s32 0, %v419
        %v421 = vrot.slane %v416, %v420
        %v423 = vmul.f32 %v415, %v421
        %v424 = vld [vmem:[%s4] sm:$0x1]
        %v426 = vlaneseq
        %v427 = vshrl.u32 %v426, 7
        %v428 = vsub.s32 0, %v427
        %v429 = vrot.slane %v424, %v428
        %v431 = vadd.f32 %v423, %v429
        %432 = vst.msk [vmem:[%s311] sm:$0xff] %vm402, %v431
        %s433 = sand.u32 %s184, 1
        %s434 = scalar_lea.sflag [#allocation4], %s433
        %s435 = sand.u32 %s184, 1
        %s436 = smul.addr %s435, 8
        %s437 = scalar_lea.vmem [#allocation7], %s436
        // Predicated region
        $region53: #{tpu_custom_call.1} parent=43 // pred_check
          %p438 = pneg %p194
        $region54: #{tpu_custom_call.1} parent=43 // pred_check_branch
          %440 = sbr.rel (%p438) target = $region56
        $region55: #{tpu_custom_call.1} parent=43 // pred_region
          %s442 = ssub.s32 128, 128
          %443 = vsyncadd %s434, %s442
          %s444 = sadd.s32 %s29, %s28
          %s445 = smul.addr %s444, 128
          %s446 = scalar_lea.hbm %s6, %s445
          %s448 = sshll.u32 %s437, 4
          %s449 = int_to_ptr.vmem [resolvable:$true] %s448
          %451 = dma.vmem_to_hbm [thread:$0]  %s449, 128, %s446, %s434
        $region56: #{tpu_custom_call.1} parent=43 // pred_fallthru
          _
      $region44: #{tpu_custom_call.1} parent=5 // pred_fallthru
        _
      %p452 = scmp.le.s32.totalorder 2, %s19
      // Predicated region
      $region57: #{tpu_custom_call.1} parent=5 // pred_check
        %p453 = pneg %p452
      $region58: #{tpu_custom_call.1} parent=5 // pred_check_branch
        %455 = sbr.rel (%p453) target = $region60
      $region59: #{tpu_custom_call.1} parent=5 // pred_region
        %s456 = ssub.s32 %s19, 2
        // Predicated region
        $region61: #{tpu_custom_call.1} parent=59 // pred_check
          %p457 = pneg %p200
        $region62: #{tpu_custom_call.1} parent=59 // pred_check_branch
          %459 = sbr.rel (%p457) target = $region64
        $region63: #{tpu_custom_call.1} parent=59 // pred_region
          %s460 = sand.u32 %s185, 1
          %s461 = scalar_lea.sflag [#allocation4], %s460
          %s462 = sand.u32 %s185, 1
          %s463 = smul.addr %s462, 8
          %s464 = scalar_lea.vmem [#allocation7], %s463
          %465 = dma.done %s461, 128
        $region64: #{tpu_custom_call.1} parent=59 // pred_fallthru
          _
      $region60: #{tpu_custom_call.1} parent=5 // pred_fallthru
        _
    $region6: #{tpu_custom_call.1} parent=1 // loop_footer
      %s23 = sadd.s32 1, %s19
    $region7: #{tpu_custom_call.1} parent=1 // loop_footer_branch
      %18 = sbr.rel target = $region3
    $region8: #{tpu_custom_call.1} parent=1 // loop_exit
      _
    %466 = vsyncpa [#allocation3], 1
    %s467 = scalar_lea.sflag [#allocation3], 1
    %468 = vsyncpa %s467, 1
    %469 = vsyncpa [#allocation6], 1
    %470 = vsyncpa [#allocation4], 1
    %s471 = scalar_lea.sflag [#allocation4], 1
    %472 = vsyncpa %s471, 1

</llo_original>
